<compile_context>
chip_gen: v7x
topology: tpu7x:2x2x1
jax: 0.10.0
libtpu: 0.0.40
codegen_flags: <defaults>
</compile_context>

<pallas_src>
import functools

import jax
import jax.numpy as jnp
from jax.experimental import pallas as pl
from jax.experimental.pallas import tpu as pltpu


def _linear_bn(x_bf16, w_ref, gb_ref, *, eps, relu):
    """x @ W on the MXU (bf16 operands, f32 accumulation), then training-mode
    BatchNorm1d (batch mean, biased variance, eps, learnable gamma/beta, all
    in f32), then optional ReLU.  The Linear bias is intentionally omitted:
    BN's mean subtraction cancels any per-feature constant bias exactly."""
    y = jnp.dot(x_bf16, w_ref[...], preferred_element_type=jnp.float32)
    mean = jnp.mean(y, axis=0, keepdims=True)
    centered = y - mean
    var = jnp.mean(centered * centered, axis=0, keepdims=True)  # biased var
    gb = gb_ref[...]                        # (2, T) f32: row 0 = gamma, row 1 = beta
    out = centered * jax.lax.rsqrt(var + eps) * gb[0:1, :] + gb[1:2, :]
    if relu:
        out = jnp.maximum(out, 0.0)
    return out                              # f32


def _fused_proj_mlp_kernel(x_ref, w1_ref, w2_ref, w3_ref,
                           gb1_ref, gb2_ref, gb3_ref,
                           o_ref, h_ref, *, eps, use_layer2):
    # x_ref : (B, K)   bf16  (full block, constant index map -> DMA'd once)
    # w1_ref: (K, H)   bf16  w2_ref: (H, H) bf16  w3_ref: (H, TN) bf16
    # gb*   : (2, H) / (2, TN) f32
    # o_ref : (B, TN)  f32   h_ref : (B, H) bf16 VMEM scratch (persists)
    j = pl.program_id(0)

    # Layers 1 (and 2): whole batch x whole hidden dim, computed once and kept
    # resident in VMEM scratch for every layer-3 feature tile.
    @pl.when(j == 0)
    def _():
        h = _linear_bn(x_ref[...], w1_ref, gb1_ref, eps=eps, relu=True)
        if use_layer2:
            h = _linear_bn(h.astype(jnp.bfloat16), w2_ref, gb2_ref,
                           eps=eps, relu=True)
        h_ref[...] = h.astype(h_ref.dtype)

    # Layer 3 (no ReLU): one lane-dense output-feature tile per grid step.
    o_ref[...] = _linear_bn(h_ref[...], w3_ref, gb3_ref,
                            eps=eps, relu=False).astype(o_ref.dtype)


def fused_projection_mlp(x, params, *, num_layers=3, eps=1e-5, tile_n=256):
    """x: (B, in_dim) f32.  params: list of 3 dicts with 'w' (in,out),
    'b' (out,), 'gamma' (out,), 'beta' (out,).  Returns (B, out_dim) f32."""
    p1, p2, p3 = params
    B, in_dim = x.shape
    hidden = p1["w"].shape[1]
    out_dim = p3["w"].shape[1]
    assert p1["w"].shape == (in_dim, hidden)
    assert p2["w"].shape == (hidden, hidden)
    assert p3["w"].shape == (hidden, out_dim)

    if num_layers == 3:
        use_layer2 = True
    elif num_layers == 2:
        use_layer2 = False
    else:
        raise Exception

    tile_n = min(tile_n, out_dim)
    assert out_dim % tile_n == 0, "out_dim must be a multiple of tile_n"
    assert tile_n == out_dim or tile_n % 128 == 0

    # bf16 operand streaming; f32 accumulation happens inside the kernel.
    x_bf = x.astype(jnp.bfloat16)
    w1 = p1["w"].astype(jnp.bfloat16)
    w2 = p2["w"].astype(jnp.bfloat16)   # still passed (unused) when num_layers==2
    w3 = p3["w"].astype(jnp.bfloat16)
    # Note: p*["b"] is deliberately NOT passed -- cancelled exactly by BN.
    gb1 = jnp.stack([p1["gamma"], p1["beta"]]).astype(jnp.float32)
    gb2 = jnp.stack([p2["gamma"], p2["beta"]]).astype(jnp.float32)
    gb3 = jnp.stack([p3["gamma"], p3["beta"]]).astype(jnp.float32)

    grid = (out_dim // tile_n,)

    # Explicit VMEM budget (conservative: assume every input is double
    # buffered), capped at v7x's 64 MiB physical VMEM.
    est = 2 * (x_bf.size + w1.size + w2.size) * 2          # bf16 inputs
    est += 2 * (gb1.size + gb2.size) * 4                   # packed gamma/beta
    est += 2 * (hidden * tile_n) * 2 + 2 * (2 * tile_n) * 4  # W3 / gb3 tiles
    est += 2 * (B * tile_n) * 4                            # output tiles
    est += B * hidden * 2                                  # hidden scratch
    vmem_limit = int(min(max(est * 5 // 4, 32 * 2**20), 64 * 2**20))

    kernel = functools.partial(_fused_proj_mlp_kernel, eps=eps,
                               use_layer2=use_layer2)

    return pl.pallas_call(
        kernel,
        out_shape=jax.ShapeDtypeStruct((B, out_dim), jnp.float32),
        grid_spec=pltpu.PrefetchScalarGridSpec(
            num_scalar_prefetch=0,
            grid=grid,
            in_specs=[
                pl.BlockSpec((B, in_dim), lambda j: (0, 0)),       # x (fetched once)
                pl.BlockSpec((in_dim, hidden), lambda j: (0, 0)),  # W1 (fetched once)
                pl.BlockSpec((hidden, hidden), lambda j: (0, 0)),  # W2 (fetched once)
                pl.BlockSpec((hidden, tile_n), lambda j: (0, j)),  # W3 feature tile
                pl.BlockSpec((2, hidden), lambda j: (0, 0)),       # gamma/beta 1
                pl.BlockSpec((2, hidden), lambda j: (0, 0)),       # gamma/beta 2
                pl.BlockSpec((2, tile_n), lambda j: (0, j)),       # gamma/beta 3 tile
            ],
            out_specs=pl.BlockSpec((B, tile_n), lambda j: (0, j)),
            scratch_shapes=[pltpu.VMEM((B, hidden), jnp.bfloat16)],
        ),
        compiler_params=pltpu.CompilerParams(
            # Grid steps > 0 reuse scratch written on step 0 -> sequential.
            dimension_semantics=("arbitrary",),
            vmem_limit_bytes=vmem_limit,
        ),
    )(x_bf, w1, w2, w3, gb1, gb2, gb3)


def projection_mlp_forward(params, x, num_layers=3):
    """Mirrors projection_MLP.forward (training-mode BatchNorm1d)."""
    return fused_projection_mlp(x, params, num_layers=num_layers)


def init_projection_mlp_params(key, in_dim, hidden_dim=2048, out_dim=2048):
    """Deterministic synthetic init matching the PyTorch module's shapes.
    The Linear bias is kept (for parity with nn.Linear) but is mathematically
    a no-op through training-mode BatchNorm, so the kernel never uses it."""
    dims = [(in_dim, hidden_dim), (hidden_dim, hidden_dim), (hidden_dim, out_dim)]
    params = []
    for din, dout in dims:
        key, kw, kb = jax.random.split(key, 3)
        bound = 1.0 / jnp.sqrt(jnp.float32(din))
        w = jax.random.uniform(kw, (din, dout), jnp.float32, -bound, bound)
        b = jax.random.uniform(kb, (dout,), jnp.float32, -bound, bound)
        gamma = jnp.ones((dout,), jnp.float32)   # BN weight init
        beta = jnp.zeros((dout,), jnp.float32)   # BN bias init
        params.append({"w": w, "b": b, "gamma": gamma, "beta": beta})
    return params


def _reference_forward(params, x, num_layers=3, eps=1e-5):
    """Pure-JAX reference of the PyTorch forward (Linear WITH bias, then
    training-mode BatchNorm1d, then ReLU except on the last layer).  Matmul
    operands are cast to bf16 to match the kernel's streaming precision."""
    def layer(x, p, relu):
        y = jnp.dot(x.astype(jnp.bfloat16), p["w"].astype(jnp.bfloat16),
                    preferred_element_type=jnp.float32) + p["b"]
        mean = jnp.mean(y, axis=0, keepdims=True)
        var = jnp.mean((y - mean) ** 2, axis=0, keepdims=True)
        y = (y - mean) * jax.lax.rsqrt(var + eps) * p["gamma"] + p["beta"]
        return jnp.maximum(y, 0.0) if relu else y

    p1, p2, p3 = params
    if num_layers == 3:
        x = layer(x, p1, True); x = layer(x, p2, True); x = layer(x, p3, False)
    elif num_layers == 2:
        x = layer(x, p1, True); x = layer(x, p3, False)
    else:
        raise Exception
    return x


if __name__ == "__main__":
    # Small shapes consistent with the module: batch=8, in_dim=128,
    # hidden=256, out=512 -> 2 feature-tile grid steps at tile_n=256.
    B, IN_DIM, HIDDEN, OUT = 8, 128, 256, 512

    key = jax.random.PRNGKey(0)
    key, kx = jax.random.split(key)
    x = jax.random.normal(kx, (B, IN_DIM), jnp.float32)

    params = init_projection_mlp_params(key, IN_DIM, HIDDEN, OUT)

    out = projection_mlp_forward(params, x, num_layers=3)
    jax.block_until_ready(out)
    assert out.shape == (B, OUT)

    ref = _reference_forward(params, x, num_layers=3)
    assert float(jnp.max(jnp.abs(out - ref))) < 2e-2, "mismatch vs JAX reference"

    print("KERNEL_OK")
</pallas_src>

<mosaic_0001>
module attributes {stable_mosaic.version = 11 : i64} {
  func.func @_fused_proj_mlp_kernel(%arg0: i32, %arg1: memref<8x128xbf16, #tpu.memory_space<vmem>>, %arg2: memref<128x256xbf16, #tpu.memory_space<vmem>>, %arg3: memref<256x256xbf16, #tpu.memory_space<vmem>>, %arg4: memref<256x256xbf16, #tpu.memory_space<vmem>>, %arg5: memref<2x256xf32, #tpu.memory_space<vmem>>, %arg6: memref<2x256xf32, #tpu.memory_space<vmem>>, %arg7: memref<2x256xf32, #tpu.memory_space<vmem>>, %arg8: memref<8x256xf32, #tpu.memory_space<vmem>>, %arg9: memref<8x256xbf16, #tpu.memory_space<vmem>>) attributes {dimension_semantics = [#tpu.dimension_semantics<arbitrary>], iteration_bounds = array<i64: 2>, scalar_prefetch = 0 : i64, scratch_operands = 1 : i64, tpu.core_type = #tpu.core_type<tc>, window_params = [{pipeline_mode = #tpu.pipeline_mode<synchronous>, transform_indices = @transform_0, window_bounds = array<i64: 8, 128>}, {pipeline_mode = #tpu.pipeline_mode<synchronous>, transform_indices = @transform_1, window_bounds = array<i64: 128, 256>}, {pipeline_mode = #tpu.pipeline_mode<synchronous>, transform_indices = @transform_2, window_bounds = array<i64: 256, 256>}, {transform_indices = @transform_3, window_bounds = array<i64: 256, 256>}, {pipeline_mode = #tpu.pipeline_mode<synchronous>, transform_indices = @transform_4, window_bounds = array<i64: 2, 256>}, {pipeline_mode = #tpu.pipeline_mode<synchronous>, transform_indices = @transform_5, window_bounds = array<i64: 2, 256>}, {transform_indices = @transform_6, window_bounds = array<i64: 2, 256>}, {transform_indices = @transform_7, window_bounds = array<i64: 8, 256>}]} {
    %c0_i32 = arith.constant 0 : i32
    %0 = arith.cmpi eq, %arg0, %c0_i32 : i32
    %1 = arith.extui %0 : i1 to i32
    %c0_i32_0 = arith.constant 0 : i32
    %2 = arith.cmpi ne, %1, %c0_i32_0 : i32
    scf.if %2 {
      %c0_13 = arith.constant 0 : index
      %c0_14 = arith.constant 0 : index
      %30 = vector.load %arg1[%c0_13, %c0_14] : memref<8x128xbf16, #tpu.memory_space<vmem>>, vector<8x128xbf16>
      %c0_15 = arith.constant 0 : index
      %c0_16 = arith.constant 0 : index
      %31 = vector.load %arg2[%c0_15, %c0_16] : memref<128x256xbf16, #tpu.memory_space<vmem>>, vector<128x256xbf16>
      %cst_17 = arith.constant dense<0.000000e+00> : vector<8x256xf32>
      %32 = tpu.matmul %30, %31, %cst_17 {dimension_numbers = #tpu.dot_dimension_numbers<[1], [0], [0], [1], [0, 0, 1, 1], [], []>} : vector<8x128xbf16>, vector<128x256xbf16>, vector<8x256xf32> -> vector<8x256xf32>
      %cst_18 = arith.constant dense<0.000000e+00> : vector<256xf32>
      %33 = vector.multi_reduction <add>, %32, %cst_18 [0] : vector<8x256xf32> to vector<256xf32>
      %34 = vector.shape_cast %33 : vector<256xf32> to vector<1x256xf32>
      %cst_19 = arith.constant 8.000000e+00 : f32
      %35 = vector.broadcast %cst_19 : f32 to vector<1x256xf32>
      %36 = arith.divf %34, %35 : vector<1x256xf32>
      %37 = vector.broadcast %36 : vector<1x256xf32> to vector<8x256xf32>
      %38 = arith.subf %32, %37 : vector<8x256xf32>
      %39 = arith.mulf %38, %38 : vector<8x256xf32>
      %cst_20 = arith.constant dense<0.000000e+00> : vector<256xf32>
      %40 = vector.multi_reduction <add>, %39, %cst_20 [0] : vector<8x256xf32> to vector<256xf32>
      %41 = vector.shape_cast %40 : vector<256xf32> to vector<1x256xf32>
      %cst_21 = arith.constant 8.000000e+00 : f32
      %42 = vector.broadcast %cst_21 : f32 to vector<1x256xf32>
      %43 = arith.divf %41, %42 : vector<1x256xf32>
      %c0_22 = arith.constant 0 : index
      %c0_23 = arith.constant 0 : index
      %44 = vector.load %arg5[%c0_22, %c0_23] : memref<2x256xf32, #tpu.memory_space<vmem>>, vector<2x256xf32>
      %cst_24 = arith.constant 9.99999974E-6 : f32
      %45 = vector.broadcast %cst_24 : f32 to vector<1x256xf32>
      %46 = arith.addf %43, %45 : vector<1x256xf32>
      %47 = math.rsqrt %46 : vector<1x256xf32>
      %48 = vector.broadcast %47 : vector<1x256xf32> to vector<8x256xf32>
      %49 = arith.mulf %38, %48 : vector<8x256xf32>
      %50 = vector.extract_strided_slice %44 {offsets = [0, 0], sizes = [1, 256], strides = [1, 1]} : vector<2x256xf32> to vector<1x256xf32>
      %51 = vector.broadcast %50 : vector<1x256xf32> to vector<8x256xf32>
      %52 = arith.mulf %49, %51 : vector<8x256xf32>
      %53 = vector.extract_strided_slice %44 {offsets = [1, 0], sizes = [1, 256], strides = [1, 1]} : vector<2x256xf32> to vector<1x256xf32>
      %54 = vector.broadcast %53 : vector<1x256xf32> to vector<8x256xf32>
      %55 = arith.addf %52, %54 : vector<8x256xf32>
      %cst_25 = arith.constant 0.000000e+00 : f32
      %56 = vector.broadcast %cst_25 : f32 to vector<8x256xf32>
      %57 = arith.maximumf %55, %56 : vector<8x256xf32>
      %58 = arith.truncf %57 : vector<8x256xf32> to vector<8x256xbf16>
      %c0_26 = arith.constant 0 : index
      %c0_27 = arith.constant 0 : index
      %59 = vector.load %arg3[%c0_26, %c0_27] : memref<256x256xbf16, #tpu.memory_space<vmem>>, vector<256x256xbf16>
      %cst_28 = arith.constant dense<0.000000e+00> : vector<8x256xf32>
      %60 = tpu.matmul %58, %59, %cst_28 {dimension_numbers = #tpu.dot_dimension_numbers<[1], [0], [0], [1], [0, 0, 1, 1], [], []>} : vector<8x256xbf16>, vector<256x256xbf16>, vector<8x256xf32> -> vector<8x256xf32>
      %cst_29 = arith.constant dense<0.000000e+00> : vector<256xf32>
      %61 = vector.multi_reduction <add>, %60, %cst_29 [0] : vector<8x256xf32> to vector<256xf32>
      %62 = vector.shape_cast %61 : vector<256xf32> to vector<1x256xf32>
      %cst_30 = arith.constant 8.000000e+00 : f32
      %63 = vector.broadcast %cst_30 : f32 to vector<1x256xf32>
      %64 = arith.divf %62, %63 : vector<1x256xf32>
      %65 = vector.broadcast %64 : vector<1x256xf32> to vector<8x256xf32>
      %66 = arith.subf %60, %65 : vector<8x256xf32>
      %67 = arith.mulf %66, %66 : vector<8x256xf32>
      %cst_31 = arith.constant dense<0.000000e+00> : vector<256xf32>
      %68 = vector.multi_reduction <add>, %67, %cst_31 [0] : vector<8x256xf32> to vector<256xf32>
      %69 = vector.shape_cast %68 : vector<256xf32> to vector<1x256xf32>
      %cst_32 = arith.constant 8.000000e+00 : f32
      %70 = vector.broadcast %cst_32 : f32 to vector<1x256xf32>
      %71 = arith.divf %69, %70 : vector<1x256xf32>
      %c0_33 = arith.constant 0 : index
      %c0_34 = arith.constant 0 : index
      %72 = vector.load %arg6[%c0_33, %c0_34] : memref<2x256xf32, #tpu.memory_space<vmem>>, vector<2x256xf32>
      %cst_35 = arith.constant 9.99999974E-6 : f32
      %73 = vector.broadcast %cst_35 : f32 to vector<1x256xf32>
      %74 = arith.addf %71, %73 : vector<1x256xf32>
      %75 = math.rsqrt %74 : vector<1x256xf32>
      %76 = vector.broadcast %75 : vector<1x256xf32> to vector<8x256xf32>
      %77 = arith.mulf %66, %76 : vector<8x256xf32>
      %78 = vector.extract_strided_slice %72 {offsets = [0, 0], sizes = [1, 256], strides = [1, 1]} : vector<2x256xf32> to vector<1x256xf32>
      %79 = vector.broadcast %78 : vector<1x256xf32> to vector<8x256xf32>
      %80 = arith.mulf %77, %79 : vector<8x256xf32>
      %81 = vector.extract_strided_slice %72 {offsets = [1, 0], sizes = [1, 256], strides = [1, 1]} : vector<2x256xf32> to vector<1x256xf32>
      %82 = vector.broadcast %81 : vector<1x256xf32> to vector<8x256xf32>
      %83 = arith.addf %80, %82 : vector<8x256xf32>
      %cst_36 = arith.constant 0.000000e+00 : f32
      %84 = vector.broadcast %cst_36 : f32 to vector<8x256xf32>
      %85 = arith.maximumf %83, %84 : vector<8x256xf32>
      %86 = arith.truncf %85 : vector<8x256xf32> to vector<8x256xbf16>
      %c0_37 = arith.constant 0 : index
      %c0_38 = arith.constant 0 : index
      %87 = vector.load %arg9[%c0_37, %c0_38] : memref<8x256xbf16, #tpu.memory_space<vmem>>, vector<8x256xbf16>
      tpu.vector_store %arg9[%c0_37, %c0_38], %86 {strides = array<i32>} : memref<8x256xbf16, #tpu.memory_space<vmem>>, vector<8x256xbf16>,
    } else {
    }
    %c0 = arith.constant 0 : index
    %c0_1 = arith.constant 0 : index
    %3 = vector.load %arg9[%c0, %c0_1] : memref<8x256xbf16, #tpu.memory_space<vmem>>, vector<8x256xbf16>
    %c0_2 = arith.constant 0 : index
    %c0_3 = arith.constant 0 : index
    %4 = vector.load %arg4[%c0_2, %c0_3] : memref<256x256xbf16, #tpu.memory_space<vmem>>, vector<256x256xbf16>
    %cst = arith.constant dense<0.000000e+00> : vector<8x256xf32>
    %5 = tpu.matmul %3, %4, %cst {dimension_numbers = #tpu.dot_dimension_numbers<[1], [0], [0], [1], [0, 0, 1, 1], [], []>} : vector<8x256xbf16>, vector<256x256xbf16>, vector<8x256xf32> -> vector<8x256xf32>
    %cst_4 = arith.constant dense<0.000000e+00> : vector<256xf32>
    %6 = vector.multi_reduction <add>, %5, %cst_4 [0] : vector<8x256xf32> to vector<256xf32>
    %7 = vector.shape_cast %6 : vector<256xf32> to vector<1x256xf32>
    %cst_5 = arith.constant 8.000000e+00 : f32
    %8 = vector.broadcast %cst_5 : f32 to vector<1x256xf32>
    %9 = arith.divf %7, %8 : vector<1x256xf32>
    %10 = vector.broadcast %9 : vector<1x256xf32> to vector<8x256xf32>
    %11 = arith.subf %5, %10 : vector<8x256xf32>
    %12 = arith.mulf %11, %11 : vector<8x256xf32>
    %cst_6 = arith.constant dense<0.000000e+00> : vector<256xf32>
    %13 = vector.multi_reduction <add>, %12, %cst_6 [0] : vector<8x256xf32> to vector<256xf32>
    %14 = vector.shape_cast %13 : vector<256xf32> to vector<1x256xf32>
    %cst_7 = arith.constant 8.000000e+00 : f32
    %15 = vector.broadcast %cst_7 : f32 to vector<1x256xf32>
    %16 = arith.divf %14, %15 : vector<1x256xf32>
    %c0_8 = arith.constant 0 : index
    %c0_9 = arith.constant 0 : index
    %17 = vector.load %arg7[%c0_8, %c0_9] : memref<2x256xf32, #tpu.memory_space<vmem>>, vector<2x256xf32>
    %cst_10 = arith.constant 9.99999974E-6 : f32
    %18 = vector.broadcast %cst_10 : f32 to vector<1x256xf32>
    %19 = arith.addf %16, %18 : vector<1x256xf32>
    %20 = math.rsqrt %19 : vector<1x256xf32>
    %21 = vector.broadcast %20 : vector<1x256xf32> to vector<8x256xf32>
    %22 = arith.mulf %11, %21 : vector<8x256xf32>
    %23 = vector.extract_strided_slice %17 {offsets = [0, 0], sizes = [1, 256], strides = [1, 1]} : vector<2x256xf32> to vector<1x256xf32>
    %24 = vector.broadcast %23 : vector<1x256xf32> to vector<8x256xf32>
    %25 = arith.mulf %22, %24 : vector<8x256xf32>
    %26 = vector.extract_strided_slice %17 {offsets = [1, 0], sizes = [1, 256], strides = [1, 1]} : vector<2x256xf32> to vector<1x256xf32>
    %27 = vector.broadcast %26 : vector<1x256xf32> to vector<8x256xf32>
    %28 = arith.addf %25, %27 : vector<8x256xf32>
    %c0_11 = arith.constant 0 : index
    %c0_12 = arith.constant 0 : index
    %29 = vector.load %arg8[%c0_11, %c0_12] : memref<8x256xf32, #tpu.memory_space<vmem>>, vector<8x256xf32>
    tpu.vector_store %arg8[%c0_11, %c0_12], %28 {strides = array<i32>} : memref<8x256xf32, #tpu.memory_space<vmem>>, vector<8x256xf32>,
    return
  }
  func.func @transform_0(%arg0: i32) -> (i32, i32) {
    %c0_i32 = arith.constant 0 : i32
    %c0_i32_0 = arith.constant 0 : i32
    %c0_i32_1 = arith.constant 0 : i32
    return %c0_i32, %c0_i32_0 : i32, i32
  }
  func.func @transform_1(%arg0: i32) -> (i32, i32) {
    %c0_i32 = arith.constant 0 : i32
    %c0_i32_0 = arith.constant 0 : i32
    %c0_i32_1 = arith.constant 0 : i32
    return %c0_i32, %c0_i32_0 : i32, i32
  }
  func.func @transform_2(%arg0: i32) -> (i32, i32) {
    %c0_i32 = arith.constant 0 : i32
    %c0_i32_0 = arith.constant 0 : i32
    %c0_i32_1 = arith.constant 0 : i32
    return %c0_i32, %c0_i32_0 : i32, i32
  }
  func.func @transform_3(%arg0: i32) -> (i32, i32) {
    %c0_i32 = arith.constant 0 : i32
    %c0_i32_0 = arith.constant 0 : i32
    return %c0_i32, %arg0 : i32, i32
  }
  func.func @transform_4(%arg0: i32) -> (i32, i32) {
    %c0_i32 = arith.constant 0 : i32
    %c0_i32_0 = arith.constant 0 : i32
    %c0_i32_1 = arith.constant 0 : i32
    return %c0_i32, %c0_i32_0 : i32, i32
  }
  func.func @transform_5(%arg0: i32) -> (i32, i32) {
    %c0_i32 = arith.constant 0 : i32
    %c0_i32_0 = arith.constant 0 : i32
    %c0_i32_1 = arith.constant 0 : i32
    return %c0_i32, %c0_i32_0 : i32, i32
  }
  func.func @transform_6(%arg0: i32) -> (i32, i32) {
    %c0_i32 = arith.constant 0 : i32
    %c0_i32_0 = arith.constant 0 : i32
    return %c0_i32, %arg0 : i32, i32
  }
  func.func @transform_7(%arg0: i32) -> (i32, i32) {
    %c0_i32 = arith.constant 0 : i32
    %c0_i32_0 = arith.constant 0 : i32
    return %c0_i32, %arg0 : i32, i32
  }
}

</mosaic_0001>

<llo_original>
// kernel: tpu_custom_call.1
$region0: #{tpu_custom_call.1}
  #allocation0 [shape = 'u32[]', space=smem, size = 0x4, offset = 0x4, fixed_abs, tag = 'smem constant byte address 0x4 - core index']
  #allocation1 [shape = 'u32[144,128]{1,0:T(1,128)}', space=vmem, size = 0x12000, scoped, tag = 'internal scratch']
  #allocation2 [shape = 'bf16[8,256]{1,0:T(8,128)(2,1)}', space=vmem, size = 0x1000, scoped, tag = 'scratch operand']
  %s0 = inlined_call_operand.hbm [shape: bf16[8,128], index: 0, kind: input, shape index: {}]
  %s1 = inlined_call_operand.hbm [shape: bf16[128,256], index: 1, kind: input, shape index: {}]
  %s2 = inlined_call_operand.hbm [shape: bf16[256,256], index: 2, kind: input, shape index: {}]
  %s3 = inlined_call_operand.hbm [shape: bf16[256,512], index: 3, kind: input, shape index: {}]
  %s4 = inlined_call_operand.vmem [shape: f32[2,256], index: 4, kind: input, shape index: {}]
  %s5 = inlined_call_operand.vmem [shape: f32[2,256], index: 5, kind: input, shape index: {}]
  %s6 = inlined_call_operand.vmem [shape: f32[2,512], index: 6, kind: input, shape index: {}]
  %s7 = inlined_call_operand.hbm [shape: f32[8,512], index: 7, kind: output, shape index: {}]
  %s8 = sld [smem:[#allocation0]]
  $region81: #{tpu_custom_call.1} parent=0
    _
  %s10 = ssub.s32 1, %s8
  %s11 = scalar_select 0, %s10, %s8
  $region1: #{tpu_custom_call.1} parent=0
    #allocation3 [shape = 'u8[2048]{0}', space=vmem, size = 0x800, scoped, tag = 'input window, operand 0, single buffered']
    #allocation4 [shape = 's32[2]{0}', space=sflag, size = 0x8, scoped, tag = 'scoped memory for tpu_custom_call.1']
    #allocation5 [shape = 's32[2]{0}', space=sflag, size = 0x8, scoped, tag = 'scoped memory for tpu_custom_call.1']
    #allocation6 [shape = 'u8[65536]{0}', space=vmem, size = 0x10000, scoped, tag = 'input window, operand 1, single buffered']
    #allocation7 [shape = 's32[1]{0}', space=sflag, size = 0x4, scoped, tag = 'scoped memory for tpu_custom_call.1']
    #allocation8 [shape = 'u8[131072]{0}', space=vmem, size = 0x20000, scoped, tag = 'input window, operand 2, single buffered']
    #allocation9 [shape = 'u8[262144]{0}', space=vmem, size = 0x40000, scoped, tag = 'input window, operand 3']
    #allocation10 [shape = 's32[2]{0}', space=sflag, size = 0x8, scoped, tag = 'scoped memory for tpu_custom_call.1']
    #allocation11 [shape = 'u8[16384]{0}', space=vmem, size = 0x4000, scoped, tag = 'output window, operand 0']
    %12 = vsyncpa [#allocation4], 0
    %13 = vsyncpa [#allocation7], 0
    %14 = vsyncpa [#allocation10], 0
    %s15 = scalar_lea.sflag [#allocation10], 1
    %16 = vsyncpa %s15, 0
    %17 = vsyncpa [#allocation5], 0
    %s18 = scalar_lea.sflag [#allocation5], 1
    %19 = vsyncpa %s18, 0
    loop: start=0, step=1, limit=4
    $region2: #{tpu_custom_call.1} parent=1 // loop_pre_header
      _
    $region3: #{tpu_custom_call.1} parent=1 // loop_header
      %s21 = sphi 0, %s25
      %p22 = scmp.ge.s32.totalorder %s21, 4
      %s29 = sphi 0, %s29
      %s31 = sphi 0, %s29
      %s32 = sphi 0, %s31
      %s46 = sphi 0, %s32
      %s50 = sphi 0, %s50
      %s52 = sphi 0, %s50
      %s53 = sphi 0, %s52
      %s67 = sphi 0, %s53
      %s71 = sphi 0, %s71
      %s73 = sphi 0, %s71
      %s74 = sphi 0, %s73
      %s88 = sphi 0, %s74
      %s94 = sphi 0, %s96
      %s97 = sphi 0, %s94
      %s98 = sphi 0, %s97
      %s114 = sphi 0, %s98
      %s118 = sphi 0, %s118
      %s120 = sphi 0, %s118
      %s121 = sphi 0, %s120
      %s135 = sphi 0, %s121
      %s139 = sphi 0, %s139
      %s141 = sphi 0, %s139
      %s142 = sphi 0, %s141
      %s156 = sphi 0, %s142
      %s162 = sphi 0, %s164
      %s165 = sphi 0, %s162
      %s166 = sphi 0, %s165
      %s182 = sphi 0, %s166
      %s188 = sphi 0, %s190
      %s191 = sphi 0, %s188
      %s192 = sphi 0, %s191
      %s208 = sphi 0, %s192
    $region4: #{tpu_custom_call.1} parent=1 // loop_header_branch
      %24 = sbr.rel (%p22) target = $region8
    $region5: #{tpu_custom_call.1} parent=1 // loop_body
      %s26 = ssub.s32 %s21, 1
      %s27 = ssub.s32 %s21, 2
      %s28 = sadd.s32 %s21, 1
      %s30 = sadd.s32 %s29, 1
      %p33 = scmp.eq.s32.totalorder %s21, 1
      %p34 = scmp.ne.s32.totalorder %s29, %s31
      %p35 = scmp.eq.s32.totalorder %s21, 0
      %p36 = por %p34, %p35
      %p37 = scmp.ne.s32.totalorder %s29, %s31
      %p38 = scmp.eq.s32.totalorder %s26, 1
      %p39 = por %p37, %p38
      %p40 = scmp.ne.s32.totalorder %s31, %s32
      %p41 = scmp.eq.s32.totalorder %s26, 0
      %p42 = por %p40, %p41
      %p43 = scmp.ne.s32.totalorder %s31, %s32
      %p44 = scmp.eq.s32.totalorder %s27, 1
      %p45 = por %p43, %p44
      %p47 = scmp.ne.s32.totalorder %s32, %s46
      %p48 = scmp.eq.s32.totalorder %s27, 0
      %p49 = por %p47, %p48
      %s51 = sadd.s32 %s50, 1
      %p54 = scmp.eq.s32.totalorder %s21, 1
      %p55 = scmp.ne.s32.totalorder %s50, %s52
      %p56 = scmp.eq.s32.totalorder %s21, 0
      %p57 = por %p55, %p56
      %p58 = scmp.ne.s32.totalorder %s50, %s52
      %p59 = scmp.eq.s32.totalorder %s26, 1
      %p60 = por %p58, %p59
      %p61 = scmp.ne.s32.totalorder %s52, %s53
      %p62 = scmp.eq.s32.totalorder %s26, 0
      %p63 = por %p61, %p62
      %p64 = scmp.ne.s32.totalorder %s52, %s53
      %p65 = scmp.eq.s32.totalorder %s27, 1
      %p66 = por %p64, %p65
      %p68 = scmp.ne.s32.totalorder %s53, %s67
      %p69 = scmp.eq.s32.totalorder %s27, 0
      %p70 = por %p68, %p69
      %s72 = sadd.s32 %s71, 1
      %p75 = scmp.eq.s32.totalorder %s21, 1
      %p76 = scmp.ne.s32.totalorder %s71, %s73
      %p77 = scmp.eq.s32.totalorder %s21, 0
      %p78 = por %p76, %p77
      %p79 = scmp.ne.s32.totalorder %s71, %s73
      %p80 = scmp.eq.s32.totalorder %s26, 1
      %p81 = por %p79, %p80
      %p82 = scmp.ne.s32.totalorder %s73, %s74
      %p83 = scmp.eq.s32.totalorder %s26, 0
      %p84 = por %p82, %p83
      %p85 = scmp.ne.s32.totalorder %s73, %s74
      %p86 = scmp.eq.s32.totalorder %s27, 1
      %p87 = por %p85, %p86
      %p89 = scmp.ne.s32.totalorder %s74, %s88
      %p90 = scmp.eq.s32.totalorder %s27, 0
      %p91 = por %p89, %p90
      %s92 = ssub.s32 %s21, %s28
      %p93 = scmp.eq.s32.totalorder %s92, 0
      %s95 = sadd.s32 %s94, 1
      %s96 = scalar_select %p93, %s94, %s95
      %p99 = pneg %p93
      %p100 = scmp.eq.s32.totalorder %s21, 1
      %p101 = por %p99, %p100
      %p102 = scmp.ne.s32.totalorder %s94, %s97
      %p103 = scmp.eq.s32.totalorder %s21, 0
      %p104 = por %p102, %p103
      %p105 = scmp.ne.s32.totalorder %s94, %s97
      %p106 = scmp.eq.s32.totalorder %s26, 1
      %p107 = por %p105, %p106
      %p108 = scmp.ne.s32.totalorder %s97, %s98
      %p109 = scmp.eq.s32.totalorder %s26, 0
      %p110 = por %p108, %p109
      %p111 = scmp.ne.s32.totalorder %s97, %s98
      %p112 = scmp.eq.s32.totalorder %s27, 1
      %p113 = por %p111, %p112
      %p115 = scmp.ne.s32.totalorder %s98, %s114
      %p116 = scmp.eq.s32.totalorder %s27, 0
      %p117 = por %p115, %p116
      %s119 = sadd.s32 %s118, 1
      %p122 = scmp.eq.s32.totalorder %s21, 1
      %p123 = scmp.ne.s32.totalorder %s118, %s120
      %p124 = scmp.eq.s32.totalorder %s21, 0
      %p125 = por %p123, %p124
      %p126 = scmp.ne.s32.totalorder %s118, %s120
      %p127 = scmp.eq.s32.totalorder %s26, 1
      %p128 = por %p126, %p127
      %p129 = scmp.ne.s32.totalorder %s120, %s121
      %p130 = scmp.eq.s32.totalorder %s26, 0
      %p131 = por %p129, %p130
      %p132 = scmp.ne.s32.totalorder %s120, %s121
      %p133 = scmp.eq.s32.totalorder %s27, 1
      %p134 = por %p132, %p133
      %p136 = scmp.ne.s32.totalorder %s121, %s135
      %p137 = scmp.eq.s32.totalorder %s27, 0
      %p138 = por %p136, %p137
      %s140 = sadd.s32 %s139, 1
      %p143 = scmp.eq.s32.totalorder %s21, 1
      %p144 = scmp.ne.s32.totalorder %s139, %s141
      %p145 = scmp.eq.s32.totalorder %s21, 0
      %p146 = por %p144, %p145
      %p147 = scmp.ne.s32.totalorder %s139, %s141
      %p148 = scmp.eq.s32.totalorder %s26, 1
      %p149 = por %p147, %p148
      %p150 = scmp.ne.s32.totalorder %s141, %s142
      %p151 = scmp.eq.s32.totalorder %s26, 0
      %p152 = por %p150, %p151
      %p153 = scmp.ne.s32.totalorder %s141, %s142
      %p154 = scmp.eq.s32.totalorder %s27, 1
      %p155 = por %p153, %p154
      %p157 = scmp.ne.s32.totalorder %s142, %s156
      %p158 = scmp.eq.s32.totalorder %s27, 0
      %p159 = por %p157, %p158
      %s160 = ssub.s32 %s21, %s28
      %p161 = scmp.eq.s32.totalorder %s160, 0
      %s163 = sadd.s32 %s162, 1
      %s164 = scalar_select %p161, %s162, %s163
      %p167 = pneg %p161
      %p168 = scmp.eq.s32.totalorder %s21, 1
      %p169 = por %p167, %p168
      %p170 = scmp.ne.s32.totalorder %s162, %s165
      %p171 = scmp.eq.s32.totalorder %s21, 0
      %p172 = por %p170, %p171
      %p173 = scmp.ne.s32.totalorder %s162, %s165
      %p174 = scmp.eq.s32.totalorder %s26, 1
      %p175 = por %p173, %p174
      %p176 = scmp.ne.s32.totalorder %s165, %s166
      %p177 = scmp.eq.s32.totalorder %s26, 0
      %p178 = por %p176, %p177
      %p179 = scmp.ne.s32.totalorder %s165, %s166
      %p180 = scmp.eq.s32.totalorder %s27, 1
      %p181 = por %p179, %p180
      %p183 = scmp.ne.s32.totalorder %s166, %s182
      %p184 = scmp.eq.s32.totalorder %s27, 0
      %p185 = por %p183, %p184
      %s186 = ssub.s32 %s21, %s28
      %p187 = scmp.eq.s32.totalorder %s186, 0
      %s189 = sadd.s32 %s188, 1
      %s190 = scalar_select %p187, %s188, %s189
      %p193 = pneg %p187
      %p194 = scmp.eq.s32.totalorder %s21, 1
      %p195 = por %p193, %p194
      %p196 = scmp.ne.s32.totalorder %s188, %s191
      %p197 = scmp.eq.s32.totalorder %s21, 0
      %p198 = por %p196, %p197
      %p199 = scmp.ne.s32.totalorder %s188, %s191
      %p200 = scmp.eq.s32.totalorder %s26, 1
      %p201 = por %p199, %p200
      %p202 = scmp.ne.s32.totalorder %s191, %s192
      %p203 = scmp.eq.s32.totalorder %s26, 0
      %p204 = por %p202, %p203
      %p205 = scmp.ne.s32.totalorder %s191, %s192
      %p206 = scmp.eq.s32.totalorder %s27, 1
      %p207 = por %p205, %p206
      %p209 = scmp.ne.s32.totalorder %s192, %s208
      %p210 = scmp.eq.s32.totalorder %s27, 0
      %p211 = por %p209, %p210
      %p212 = scmp.le.s32.totalorder 1, %s21
      %p213 = scmp.lt.s32.totalorder %s21, 3
      %p214 = pnand %p212, %p213
      %p215 = pneg %p214
      // Predicated region
      $region9: #{tpu_custom_call.1} parent=5 // pred_check
        _
      $region10: #{tpu_custom_call.1} parent=5 // pred_check_branch
        %217 = sbr.rel (%p214) target = $region12
      $region11: #{tpu_custom_call.1} parent=5 // pred_region
        %s218 = ssub.s32 %s21, 1
        // Predicated region
        $region13: #{tpu_custom_call.1} parent=11 // pred_check
          %p219 = pneg %p42
        $region14: #{tpu_custom_call.1} parent=11 // pred_check_branch
          %221 = sbr.rel (%p219) target = $region16
        $region15: #{tpu_custom_call.1} parent=11 // pred_region
          %s223 = ssub.s32 64, 64
          %224 = vsyncadd [#allocation4], %s223
          %s226 = sshll.u32 [#allocation3], 4
          %s227 = int_to_ptr.vmem [resolvable:$true] %s226
          %229 = dma.hbm_to_vmem [thread:$0]  %s0, 64, %s227, [#allocation4]
        $region16: #{tpu_custom_call.1} parent=11 // pred_fallthru
          _
        // Predicated region
        $region17: #{tpu_custom_call.1} parent=11 // pred_check
          %p230 = pneg %p63
        $region18: #{tpu_custom_call.1} parent=11 // pred_check_branch
          %232 = sbr.rel (%p230) target = $region20
        $region19: #{tpu_custom_call.1} parent=11 // pred_region
          %s234 = ssub.s32 2048, 2048
          %235 = vsyncadd [#allocation7], %s234
          %s236 = sshll.u32 [#allocation6], 4
          %s237 = int_to_ptr.vmem [resolvable:$true] %s236
          %242 = dma.hbm_to_vmem [thread:$0]  %s1, 2048, %s237, [#allocation7], 128, 128, 8
        $region20: #{tpu_custom_call.1} parent=11 // pred_fallthru
          _
        // Predicated region
        $region21: #{tpu_custom_call.1} parent=11 // pred_check
          %p243 = pneg %p84
        $region22: #{tpu_custom_call.1} parent=11 // pred_check_branch
          %245 = sbr.rel (%p243) target = $region24
        $region23: #{tpu_custom_call.1} parent=11 // pred_region
          %s247 = ssub.s32 4096, 4096
          %248 = vsyncadd [#allocation7], %s247
          %s249 = sshll.u32 [#allocation8], 4
          %s250 = int_to_ptr.vmem [resolvable:$true] %s249
          %255 = dma.hbm_to_vmem [thread:$0]  %s2, 4096, %s250, [#allocation7], 128, 128, 8
        $region24: #{tpu_custom_call.1} parent=11 // pred_fallthru
          _
        // Predicated region
        $region25: #{tpu_custom_call.1} parent=11 // pred_check
          %p256 = pneg %p131
        $region26: #{tpu_custom_call.1} parent=11 // pred_check_branch
          %258 = sbr.rel (%p256) target = $region28
        $region27: #{tpu_custom_call.1} parent=11 // pred_region
          _
        $region28: #{tpu_custom_call.1} parent=11 // pred_fallthru
          _
        // Predicated region
        $region29: #{tpu_custom_call.1} parent=11 // pred_check
          %p259 = pneg %p152
        $region30: #{tpu_custom_call.1} parent=11 // pred_check_branch
          %261 = sbr.rel (%p259) target = $region32
        $region31: #{tpu_custom_call.1} parent=11 // pred_region
          _
        $region32: #{tpu_custom_call.1} parent=11 // pred_fallthru
          _
      $region12: #{tpu_custom_call.1} parent=5 // pred_fallthru
        _
      %p262 = scmp.lt.s32.totalorder %s21, 2
      // Predicated region
      $region33: #{tpu_custom_call.1} parent=5 // pred_check
        %p263 = pneg %p262
      $region34: #{tpu_custom_call.1} parent=5 // pred_check_branch
        %265 = sbr.rel (%p263) target = $region36
      $region35: #{tpu_custom_call.1} parent=5 // pred_region
        // Predicated region
        $region37: #{tpu_custom_call.1} parent=35 // pred_check
          %p266 = pneg %p104
        $region38: #{tpu_custom_call.1} parent=35 // pred_check_branch
          %268 = sbr.rel (%p266) target = $region40
        $region39: #{tpu_custom_call.1} parent=35 // pred_region
          %s269 = sand.u32 %s94, 1
          %s270 = scalar_lea.sflag [#allocation10], %s269
          %s271 = sand.u32 %s94, 1
          %s272 = smul.addr %s271, 256
          %s273 = scalar_lea.vmem [#allocation9], %s272
          %s274 = smul.u32 2, %s21
          %s276 = ssub.s32 4096, 4096
          %277 = vsyncadd %s270, %s276
          %s278 = smul.addr %s274, 64
          %s279 = scalar_lea.hbm %s3, %s278
          %s280 = sshll.u32 %s273, 4
          %s281 = int_to_ptr.vmem [resolvable:$true] %s280
          %286 = dma.hbm_to_vmem [thread:$0]  %s279, 4096, %s281, %s270, 256, 128, 8
        $region40: #{tpu_custom_call.1} parent=35 // pred_fallthru
          _
        // Predicated region
        $region41: #{tpu_custom_call.1} parent=35 // pred_check
          %p287 = pneg %p172
        $region42: #{tpu_custom_call.1} parent=35 // pred_check_branch
          %289 = sbr.rel (%p287) target = $region44
        $region43: #{tpu_custom_call.1} parent=35 // pred_region
          %s290 = smul.u32 2, %s21
          %p291 = scmp.lt.s32.totalorder %s290, 3
          %s292 = scalar_select %p291, %s290, 3
          %s293 = smul.addr %s292, 2
          %s294 = scalar_lea.vmem %s6, %s293
          %s295 = smul.u32 2, %s21
        $region44: #{tpu_custom_call.1} parent=35 // pred_fallthru
          _
      $region36: #{tpu_custom_call.1} parent=5 // pred_fallthru
        _
      %p296 = scmp.le.s32.totalorder 1, %s21
      %p297 = scmp.lt.s32.totalorder %s21, 3
      %p298 = pnand %p296, %p297
      %p299 = pneg %p298
      // Predicated region
      $region45: #{tpu_custom_call.1} parent=5 // pred_check
        _
      $region46: #{tpu_custom_call.1} parent=5 // pred_check_branch
        %301 = sbr.rel (%p298) target = $region48
      $region47: #{tpu_custom_call.1} parent=5 // pred_region
        %s302 = ssub.s32 %s21, 1
        // Predicated region
        $region49: #{tpu_custom_call.1} parent=47 // pred_check
          %p303 = pneg %p42
        $region50: #{tpu_custom_call.1} parent=47 // pred_check_branch
          %305 = sbr.rel (%p303) target = $region52
        $region51: #{tpu_custom_call.1} parent=47 // pred_region
          %306 = dma.done [#allocation4], 64
        $region52: #{tpu_custom_call.1} parent=47 // pred_fallthru
          _
        // Predicated region
        $region53: #{tpu_custom_call.1} parent=47 // pred_check
          %p307 = pneg %p63
        $region54: #{tpu_custom_call.1} parent=47 // pred_check_branch
          %309 = sbr.rel (%p307) target = $region56
        $region55: #{tpu_custom_call.1} parent=47 // pred_region
          %310 = dma.done [#allocation7], 2048
        $region56: #{tpu_custom_call.1} parent=47 // pred_fallthru
          _
        // Predicated region
        $region57: #{tpu_custom_call.1} parent=47 // pred_check
          %p311 = pneg %p84
        $region58: #{tpu_custom_call.1} parent=47 // pred_check_branch
          %313 = sbr.rel (%p311) target = $region60
        $region59: #{tpu_custom_call.1} parent=47 // pred_region
          %314 = dma.done [#allocation7], 4096
        $region60: #{tpu_custom_call.1} parent=47 // pred_fallthru
          _
        %s315 = sand.u32 %s97, 1
        %s316 = scalar_lea.sflag [#allocation10], %s315
        %s317 = sand.u32 %s97, 1
        %s318 = smul.addr %s317, 256
        %s319 = scalar_lea.vmem [#allocation9], %s318
        // Predicated region
        $region61: #{tpu_custom_call.1} parent=47 // pred_check
          %p320 = pneg %p110
        $region62: #{tpu_custom_call.1} parent=47 // pred_check_branch
          %322 = sbr.rel (%p320) target = $region64
        $region63: #{tpu_custom_call.1} parent=47 // pred_region
          %323 = dma.done %s316, 4096
        $region64: #{tpu_custom_call.1} parent=47 // pred_fallthru
          _
        %p324 = pneg %p42
        %p325 = pneg %p39
        %p326 = pneg %p63
        %p327 = pneg %p60
        %p328 = pneg %p84
        %p329 = pneg %p81
        %s330 = sand.u32 %s97, 1
        %s331 = scalar_lea.sflag [#allocation10], %s330
        %s332 = sand.u32 %s97, 1
        %s333 = smul.addr %s332, 256
        %s334 = scalar_lea.vmem [#allocation9], %s333
        %p335 = pneg %p110
        %p336 = pneg %p107
        %p337 = pneg %p131
        %p338 = pneg %p128
        %p339 = pneg %p152
        %p340 = pneg %p149
        %s341 = smul.u32 2, %s26
        %p342 = scmp.lt.s32.totalorder %s341, 3
        %s343 = scalar_select %p342, %s341, 3
        %s344 = smul.addr %s343, 2
        %s345 = scalar_lea.vmem %s6, %s344
        %p346 = pneg %p178
        %p347 = pneg %p175
        %p348 = pneg %p204
        %p349 = pneg %p201
        %s350 = sand.u32 %s191, 1
        %s351 = scalar_lea.sflag [#allocation5], %s350
        %s352 = sand.u32 %s191, 1
        %s353 = smul.addr %s352, 16
        %s354 = scalar_lea.vmem [#allocation11], %s353
        %s355 = smul.u32 2, %s26
        %s356 = smul.u32 2, %s26
        %p357 = scmp.lt.s32.totalorder %s356, 3
        %s358 = scalar_select %p357, %s356, 3
        %s359 = smul.addr %s358, 2
        %s360 = scalar_lea.vmem %s6, %s359
        %s361 = smul.u32 2, %s26
        %s362 = smul.u32 2, %s26
        %p364 = scmp.eq.s32.totalorder %s26, 0
        // Predicated region
        $region65: #{tpu_custom_call.1} parent=47 // pred_check
          %p365 = pneg %p364
        $region66: #{tpu_custom_call.1} parent=47 // pred_check_branch
          %367 = sbr.rel (%p365) target = $region68
        $region67: #{tpu_custom_call.1} parent=47 // pred_region
          %v368 = vld [vmem:[#allocation3] sm:$0xf]
          %v369 = vld [vmem:[#allocation6] sm:$0xff]
          %v370 = vld [vmem:[#allocation6 + $0x8] sm:$0xff]
          %v371 = vld [vmem:[#allocation6 + $0x10] sm:$0xff]
          %v372 = vld [vmem:[#allocation6 + $0x18] sm:$0xff]
          %v373 = vld [vmem:[#allocation6 + $0x20] sm:$0xff]
          %v374 = vld [vmem:[#allocation6 + $0x28] sm:$0xff]
          %v375 = vld [vmem:[#allocation6 + $0x30] sm:$0xff]
          %v376 = vld [vmem:[#allocation6 + $0x38] sm:$0xff]
          %v377 = vld [vmem:[#allocation6 + $0x40] sm:$0xff]
          %v378 = vld [vmem:[#allocation6 + $0x48] sm:$0xff]
          %v379 = vld [vmem:[#allocation6 + $0x50] sm:$0xff]
          %v380 = vld [vmem:[#allocation6 + $0x58] sm:$0xff]
          %v381 = vld [vmem:[#allocation6 + $0x60] sm:$0xff]
          %v382 = vld [vmem:[#allocation6 + $0x68] sm:$0xff]
          %v383 = vld [vmem:[#allocation6 + $0x70] sm:$0xff]
          %v384 = vld [vmem:[#allocation6 + $0x78] sm:$0xff]
          %v401 = vunpack.c.l.b16 %v369
          %v402 = vunpack.c.h.b16 %v369
          %v403 = vunpack.c.l.b16 %v370
          %v404 = vunpack.c.h.b16 %v370
          %v405 = vunpack.c.l.b16 %v371
          %v406 = vunpack.c.h.b16 %v371
          %v407 = vunpack.c.l.b16 %v372
          %v408 = vunpack.c.h.b16 %v372
          %v409 = vunpack.c.l.b16 %v373
          %v410 = vunpack.c.h.b16 %v373
          %v411 = vunpack.c.l.b16 %v374
          %v412 = vunpack.c.h.b16 %v374
          %v413 = vunpack.c.l.b16 %v375
          %v414 = vunpack.c.h.b16 %v375
          %v415 = vunpack.c.l.b16 %v376
          %v416 = vunpack.c.h.b16 %v376
          %v417 = vunpack.c.l.b16 %v377
          %v418 = vunpack.c.h.b16 %v377
          %v419 = vunpack.c.l.b16 %v378
          %v420 = vunpack.c.h.b16 %v378
          %v421 = vunpack.c.l.b16 %v379
          %v422 = vunpack.c.h.b16 %v379
          %v423 = vunpack.c.l.b16 %v380
          %v424 = vunpack.c.h.b16 %v380
          %v425 = vunpack.c.l.b16 %v381
          %v426 = vunpack.c.h.b16 %v381
          %v427 = vunpack.c.l.b16 %v382
          %v428 = vunpack.c.h.b16 %v382
          %v429 = vunpack.c.l.b16 %v383
          %v430 = vunpack.c.h.b16 %v383
          %v431 = vunpack.c.l.b16 %v384
          %v432 = vunpack.c.h.b16 %v384
          %v433 = vpack.c.b16 %v403, %v401
          %v434 = vpack.c.b16 %v404, %v402
          %v435 = vpack.c.b16 %v407, %v405
          %v436 = vpack.c.b16 %v408, %v406
          %v437 = vpack.c.b16 %v411, %v409
          %v438 = vpack.c.b16 %v412, %v410
          %v439 = vpack.c.b16 %v415, %v413
          %v440 = vpack.c.b16 %v416, %v414
          %v441 = vpack.c.b16 %v419, %v417
          %v442 = vpack.c.b16 %v420, %v418
          %v443 = vpack.c.b16 %v423, %v421
          %v444 = vpack.c.b16 %v424, %v422
          %v445 = vpack.c.b16 %v427, %v425
          %v446 = vpack.c.b16 %v428, %v426
          %v447 = vpack.c.b16 %v431, %v429
          %v448 = vpack.c.b16 %v432, %v430
          %465 = vmatprep.subr.bf16.mxu0 %v434
          %466 = vmatpush1.bf16.msra.mxu0 %v433
          %467 = vmatprep.subr.bf16.mxu0 %v436
          %468 = vmatpush1.bf16.msra.mxu0 %v435
          %469 = vmatprep.subr.bf16.mxu0 %v438
          %470 = vmatpush1.bf16.msra.mxu0 %v437
          %471 = vmatprep.subr.bf16.mxu0 %v440
          %472 = vmatpush1.bf16.msra.mxu0 %v439
          %473 = vmatprep.subr.bf16.mxu0 %v442
          %474 = vmatpush1.bf16.msra.mxu0 %v441
          %475 = vmatprep.subr.bf16.mxu0 %v444
          %476 = vmatpush1.bf16.msra.mxu0 %v443
          %477 = vmatprep.subr.bf16.mxu0 %v446
          %478 = vmatpush1.bf16.msra.mxu0 %v445
          %479 = vmatprep.subr.bf16.mxu0 %v448
          %480 = vmatpush1.bf16.msra.mxu0 %v447
          %481 = vmatprep.subr.bf16.mxu0 0
          %482 = vmatpush1.bf16.msra.mxu0 0
          %483 = vmatprep.subr.bf16.mxu0 0
          %484 = vmatpush1.bf16.msra.mxu0 0
          %485 = vmatprep.subr.bf16.mxu0 0
          %486 = vmatpush1.bf16.msra.mxu0 0
          %487 = vmatprep.subr.bf16.mxu0 0
          %488 = vmatpush1.bf16.msra.mxu0 0
          %489 = vmatprep.subr.bf16.mxu0 0
          %490 = vmatpush1.bf16.msra.mxu0 0
          %491 = vmatprep.subr.bf16.mxu0 0
          %492 = vmatpush1.bf16.msra.mxu0 0
          %493 = vmatprep.subr.bf16.mxu0 0
          %494 = vmatpush1.bf16.msra.mxu0 0
          %495 = vmatprep.subr.bf16.mxu0 0
          %496 = vmatpush1.bf16.msra.mxu0 0
          %497 = vmatprep.mubr.bf16.mxu0 0
          %498 = vmatmul.mubr.bf16.gmra.mrb[0].mxu0 %v368
          %v499 = vpop.f32.mrb[0].mxu0
          %v500 = vadd.f32 0.0, %v499
          %v501 = vpop.f32.mrb[0].mxu0
          %v502 = vadd.f32 0.0, %v501
          %v503 = vpop.f32.mrb[0].mxu0
          %v504 = vpop.f32.mrb[0].mxu0
          %505 = vdwg.mxu0
          %v506 = vrot.slane %v500, 4
          %v507 = vadd.f32 %v500, %v506
          %v508 = vrot.slane %v507, 2
          %v509 = vadd.f32 %v507, %v508
          %v510 = vrot.slane %v509, 1
          %v511 = vadd.f32 %v509, %v510
          %v512 = vrot.slane %v502, 4
          %v513 = vadd.f32 %v502, %v512
          %v514 = vrot.slane %v513, 2
          %v515 = vadd.f32 %v513, %v514
          %v516 = vrot.slane %v515, 1
          %v517 = vadd.f32 %v515, %v516
          %v518 = vrcp.pop 8.0
          %v519 = vmul.f32 %v511, %v518
          %v520 = vmul.f32 %v517, %v518
          %v521 = vsub.f32 %v500, %v519
          %v522 = vsub.f32 %v502, %v520
          %v523 = vmul.f32 %v521, %v521
          %v524 = vmul.f32 %v522, %v522
          %v525 = vrot.slane %v523, 4
          %v526 = vadd.f32 %v523, %v525
          %v527 = vrot.slane %v526, 2
          %v528 = vadd.f32 %v526, %v527
          %v529 = vrot.slane %v528, 1
          %v530 = vadd.f32 %v528, %v529
          %v531 = vrot.slane %v524, 4
          %v532 = vadd.f32 %v524, %v531
          %v533 = vrot.slane %v532, 2
          %v534 = vadd.f32 %v532, %v533
          %v535 = vrot.slane %v534, 1
          %v536 = vadd.f32 %v534, %v535
          %v537 = vmul.f32 %v530, %v518
          %v538 = vmul.f32 %v536, %v518
          %v539 = vld [vmem:[%s4] sm:$0xf]
          %v540 = vadd.f32 %v537, 1e-05
          %v541 = vadd.f32 %v538, 1e-05
          %v542 = vrsqrt.pop %v540
          %v543 = vrsqrt.pop %v541
          %v544 = vmul.f32 %v521, %v542
          %v545 = vmul.f32 %v522, %v543
          %v547 = vlaneseq
          %v548 = vshrl.u32 %v547, 7
          %v549 = vsub.s32 0, %v548
          %v550 = vrot.slane %v539, %v549
          %v551 = vlaneseq
          %v552 = vshrl.u32 %v551, 7
          %v553 = vsub.s32 2, %v552
          %v554 = vrot.slane %v539, %v553
          %v557 = vlaneseq
          %v558 = vshrl.u32 %v557, 7
          %v559 = vsub.s32 0, %v558
          %v560 = vrot.slane %v550, %v559
          %v561 = vlaneseq
          %v562 = vshrl.u32 %v561, 7
          %v563 = vsub.s32 0, %v562
          %v564 = vrot.slane %v554, %v563
          %v565 = vmul.f32 %v544, %v560
          %v566 = vmul.f32 %v545, %v564
          %v567 = vlaneseq
          %v568 = vshrl.u32 %v567, 7
          %v569 = vsub.s32 1, %v568
          %v570 = vrot.slane %v539, %v569
          %v571 = vlaneseq
          %v572 = vshrl.u32 %v571, 7
          %v573 = vsub.s32 3, %v572
          %v574 = vrot.slane %v539, %v573
          %v577 = vlaneseq
          %v578 = vshrl.u32 %v577, 7
          %v579 = vsub.s32 1, %v578
          %v580 = vrot.slane %v570, %v579
          %v581 = vlaneseq
          %v582 = vshrl.u32 %v581, 7
          %v583 = vsub.s32 1, %v582
          %v584 = vrot.slane %v574, %v583
          %v585 = vadd.f32 %v565, %v580
          %v586 = vadd.f32 %v566, %v584
          %v587 = vmax.f32 %v585, 0.0
          %v588 = vmax.f32 %v586, 0.0
          %v589 = vpack.c.bf16 %v587, %v587
          %v590 = vpack.c.bf16 %v588, %v588
          %v591 = vld [vmem:[#allocation8] sm:$0xff]
          %v592 = vld [vmem:[#allocation8 + $0x8] sm:$0xff]
          %v593 = vld [vmem:[#allocation8 + $0x10] sm:$0xff]
          %v594 = vld [vmem:[#allocation8 + $0x18] sm:$0xff]
          %v595 = vld [vmem:[#allocation8 + $0x20] sm:$0xff]
          %v596 = vld [vmem:[#allocation8 + $0x28] sm:$0xff]
          %v597 = vld [vmem:[#allocation8 + $0x30] sm:$0xff]
          %v598 = vld [vmem:[#allocation8 + $0x38] sm:$0xff]
          %v599 = vld [vmem:[#allocation8 + $0x40] sm:$0xff]
          %v600 = vld [vmem:[#allocation8 + $0x48] sm:$0xff]
          %v601 = vld [vmem:[#allocation8 + $0x50] sm:$0xff]
          %v602 = vld [vmem:[#allocation8 + $0x58] sm:$0xff]
          %v603 = vld [vmem:[#allocation8 + $0x60] sm:$0xff]
          %v604 = vld [vmem:[#allocation8 + $0x68] sm:$0xff]
          %v605 = vld [vmem:[#allocation8 + $0x70] sm:$0xff]
          %v606 = vld [vmem:[#allocation8 + $0x78] sm:$0xff]
          %v607 = vld [vmem:[#allocation8 + $0x80] sm:$0xff]
          %v608 = vld [vmem:[#allocation8 + $0x88] sm:$0xff]
          %v609 = vld [vmem:[#allocation8 + $0x90] sm:$0xff]
          %v610 = vld [vmem:[#allocation8 + $0x98] sm:$0xff]
          %v611 = vld [vmem:[#allocation8 + $0xa0] sm:$0xff]
          %v612 = vld [vmem:[#allocation8 + $0xa8] sm:$0xff]
          %v613 = vld [vmem:[#allocation8 + $0xb0] sm:$0xff]
          %v614 = vld [vmem:[#allocation8 + $0xb8] sm:$0xff]
          %v615 = vld [vmem:[#allocation8 + $0xc0] sm:$0xff]
          %v616 = vld [vmem:[#allocation8 + $0xc8] sm:$0xff]
          %v617 = vld [vmem:[#allocation8 + $0xd0] sm:$0xff]
          %v618 = vld [vmem:[#allocation8 + $0xd8] sm:$0xff]
          %v619 = vld [vmem:[#allocation8 + $0xe0] sm:$0xff]
          %v620 = vld [vmem:[#allocation8 + $0xe8] sm:$0xff]
          %v621 = vld [vmem:[#allocation8 + $0xf0] sm:$0xff]
          %v622 = vld [vmem:[#allocation8 + $0xf8] sm:$0xff]
          %v655 = vunpack.c.l.b16 %v591
          %v656 = vunpack.c.h.b16 %v591
          %v657 = vunpack.c.l.b16 %v592
          %v658 = vunpack.c.h.b16 %v592
          %v659 = vunpack.c.l.b16 %v593
          %v660 = vunpack.c.h.b16 %v593
          %v661 = vunpack.c.l.b16 %v594
          %v662 = vunpack.c.h.b16 %v594
          %v663 = vunpack.c.l.b16 %v595
          %v664 = vunpack.c.h.b16 %v595
          %v665 = vunpack.c.l.b16 %v596
          %v666 = vunpack.c.h.b16 %v596
          %v667 = vunpack.c.l.b16 %v597
          %v668 = vunpack.c.h.b16 %v597
          %v669 = vunpack.c.l.b16 %v598
          %v670 = vunpack.c.h.b16 %v598
          %v671 = vunpack.c.l.b16 %v599
          %v672 = vunpack.c.h.b16 %v599
          %v673 = vunpack.c.l.b16 %v600
          %v674 = vunpack.c.h.b16 %v600
          %v675 = vunpack.c.l.b16 %v601
          %v676 = vunpack.c.h.b16 %v601
          %v677 = vunpack.c.l.b16 %v602
          %v678 = vunpack.c.h.b16 %v602
          %v679 = vunpack.c.l.b16 %v603
          %v680 = vunpack.c.h.b16 %v603
          %v681 = vunpack.c.l.b16 %v604
          %v682 = vunpack.c.h.b16 %v604
          %v683 = vunpack.c.l.b16 %v605
          %v684 = vunpack.c.h.b16 %v605
          %v685 = vunpack.c.l.b16 %v606
          %v686 = vunpack.c.h.b16 %v606
          %v687 = vunpack.c.l.b16 %v607
          %v688 = vunpack.c.h.b16 %v607
          %v689 = vunpack.c.l.b16 %v608
          %v690 = vunpack.c.h.b16 %v608
          %v691 = vunpack.c.l.b16 %v609
          %v692 = vunpack.c.h.b16 %v609
          %v693 = vunpack.c.l.b16 %v610
          %v694 = vunpack.c.h.b16 %v610
          %v695 = vunpack.c.l.b16 %v611
          %v696 = vunpack.c.h.b16 %v611
          %v697 = vunpack.c.l.b16 %v612
          %v698 = vunpack.c.h.b16 %v612
          %v699 = vunpack.c.l.b16 %v613
          %v700 = vunpack.c.h.b16 %v613
          %v701 = vunpack.c.l.b16 %v614
          %v702 = vunpack.c.h.b16 %v614
          %v703 = vunpack.c.l.b16 %v615
          %v704 = vunpack.c.h.b16 %v615
          %v705 = vunpack.c.l.b16 %v616
          %v706 = vunpack.c.h.b16 %v616
          %v707 = vunpack.c.l.b16 %v617
          %v708 = vunpack.c.h.b16 %v617
          %v709 = vunpack.c.l.b16 %v618
          %v710 = vunpack.c.h.b16 %v618
          %v711 = vunpack.c.l.b16 %v619
          %v712 = vunpack.c.h.b16 %v619
          %v713 = vunpack.c.l.b16 %v620
          %v714 = vunpack.c.h.b16 %v620
          %v715 = vunpack.c.l.b16 %v621
          %v716 = vunpack.c.h.b16 %v621
          %v717 = vunpack.c.l.b16 %v622
          %v718 = vunpack.c.h.b16 %v622
          %v719 = vpack.c.b16 %v657, %v655
          %v720 = vpack.c.b16 %v658, %v656
          %v721 = vpack.c.b16 %v661, %v659
          %v722 = vpack.c.b16 %v662, %v660
          %v723 = vpack.c.b16 %v665, %v663
          %v724 = vpack.c.b16 %v666, %v664
          %v725 = vpack.c.b16 %v669, %v667
          %v726 = vpack.c.b16 %v670, %v668
          %v727 = vpack.c.b16 %v673, %v671
          %v728 = vpack.c.b16 %v674, %v672
          %v729 = vpack.c.b16 %v677, %v675
          %v730 = vpack.c.b16 %v678, %v676
          %v731 = vpack.c.b16 %v681, %v679
          %v732 = vpack.c.b16 %v682, %v680
          %v733 = vpack.c.b16 %v685, %v683
          %v734 = vpack.c.b16 %v686, %v684
          %v735 = vpack.c.b16 %v689, %v687
          %v736 = vpack.c.b16 %v690, %v688
          %v737 = vpack.c.b16 %v693, %v691
          %v738 = vpack.c.b16 %v694, %v692
          %v739 = vpack.c.b16 %v697, %v695
          %v740 = vpack.c.b16 %v698, %v696
          %v741 = vpack.c.b16 %v701, %v699
          %v742 = vpack.c.b16 %v702, %v700
          %v743 = vpack.c.b16 %v705, %v703
          %v744 = vpack.c.b16 %v706, %v704
          %v745 = vpack.c.b16 %v709, %v707
          %v746 = vpack.c.b16 %v710, %v708
          %v747 = vpack.c.b16 %v713, %v711
          %v748 = vpack.c.b16 %v714, %v712
          %v749 = vpack.c.b16 %v717, %v715
          %v750 = vpack.c.b16 %v718, %v716
          %783 = vmatprep.subr.bf16.mxu0 %v720
          %784 = vmatpush1.bf16.msra.mxu0 %v719
          %785 = vmatprep.subr.bf16.mxu0 %v722
          %786 = vmatpush1.bf16.msra.mxu0 %v721
          %787 = vmatprep.subr.bf16.mxu0 %v724
          %788 = vmatpush1.bf16.msra.mxu0 %v723
          %789 = vmatprep.subr.bf16.mxu0 %v726
          %790 = vmatpush1.bf16.msra.mxu0 %v725
          %791 = vmatprep.subr.bf16.mxu0 %v728
          %792 = vmatpush1.bf16.msra.mxu0 %v727
          %793 = vmatprep.subr.bf16.mxu0 %v730
          %794 = vmatpush1.bf16.msra.mxu0 %v729
          %795 = vmatprep.subr.bf16.mxu0 %v732
          %796 = vmatpush1.bf16.msra.mxu0 %v731
          %797 = vmatprep.subr.bf16.mxu0 %v734
          %798 = vmatpush1.bf16.msra.mxu0 %v733
          %799 = vmatprep.subr.bf16.mxu0 %v736
          %800 = vmatpush1.bf16.msra.mxu0 %v735
          %801 = vmatprep.subr.bf16.mxu0 %v738
          %802 = vmatpush1.bf16.msra.mxu0 %v737
          %803 = vmatprep.subr.bf16.mxu0 %v740
          %804 = vmatpush1.bf16.msra.mxu0 %v739
          %805 = vmatprep.subr.bf16.mxu0 %v742
          %806 = vmatpush1.bf16.msra.mxu0 %v741
          %807 = vmatprep.subr.bf16.mxu0 %v744
          %808 = vmatpush1.bf16.msra.mxu0 %v743
          %809 = vmatprep.subr.bf16.mxu0 %v746
          %810 = vmatpush1.bf16.msra.mxu0 %v745
          %811 = vmatprep.subr.bf16.mxu0 %v748
          %812 = vmatpush1.bf16.msra.mxu0 %v747
          %813 = vmatprep.subr.bf16.mxu0 %v750
          %814 = vmatpush1.bf16.msra.mxu0 %v749
          %815 = vmatprep.mubr.bf16.mxu0 %v590
          %816 = vmatmul.mubr.bf16.gmra.mrb[0].mxu0 %v589
          %v817 = vpop.f32.mrb[0].mxu0
          %v818 = vadd.f32 0.0, %v817
          %v819 = vpop.f32.mrb[0].mxu0
          %v820 = vadd.f32 0.0, %v819
          %v821 = vpop.f32.mrb[0].mxu0
          %v822 = vpop.f32.mrb[0].mxu0
          %823 = vdwg.mxu0
          %v824 = vrot.slane %v818, 4
          %v825 = vadd.f32 %v818, %v824
          %v826 = vrot.slane %v825, 2
          %v827 = vadd.f32 %v825, %v826
          %v828 = vrot.slane %v827, 1
          %v829 = vadd.f32 %v827, %v828
          %v830 = vrot.slane %v820, 4
          %v831 = vadd.f32 %v820, %v830
          %v832 = vrot.slane %v831, 2
          %v833 = vadd.f32 %v831, %v832
          %v834 = vrot.slane %v833, 1
          %v835 = vadd.f32 %v833, %v834
          %v836 = vmul.f32 %v829, %v518
          %v837 = vmul.f32 %v835, %v518
          %v838 = vsub.f32 %v818, %v836
          %v839 = vsub.f32 %v820, %v837
          %v840 = vmul.f32 %v838, %v838
          %v841 = vmul.f32 %v839, %v839
          %v842 = vrot.slane %v840, 4
          %v843 = vadd.f32 %v840, %v842
          %v844 = vrot.slane %v843, 2
          %v845 = vadd.f32 %v843, %v844
          %v846 = vrot.slane %v845, 1
          %v847 = vadd.f32 %v845, %v846
          %v848 = vrot.slane %v841, 4
          %v849 = vadd.f32 %v841, %v848
          %v850 = vrot.slane %v849, 2
          %v851 = vadd.f32 %v849, %v850
          %v852 = vrot.slane %v851, 1
          %v853 = vadd.f32 %v851, %v852
          %v854 = vmul.f32 %v847, %v518
          %v855 = vmul.f32 %v853, %v518
          %v856 = vld [vmem:[%s5] sm:$0xf]
          %v857 = vadd.f32 %v854, 1e-05
          %v858 = vadd.f32 %v855, 1e-05
          %v859 = vrsqrt.pop %v857
          %v860 = vrsqrt.pop %v858
          %v861 = vmul.f32 %v838, %v859
          %v862 = vmul.f32 %v839, %v860
          %v864 = vlaneseq
          %v865 = vshrl.u32 %v864, 7
          %v866 = vsub.s32 0, %v865
          %v867 = vrot.slane %v856, %v866
          %v868 = vlaneseq
          %v869 = vshrl.u32 %v868, 7
          %v870 = vsub.s32 2, %v869
          %v871 = vrot.slane %v856, %v870
          %v874 = vlaneseq
          %v875 = vshrl.u32 %v874, 7
          %v876 = vsub.s32 0, %v875
          %v877 = vrot.slane %v867, %v876
          %v878 = vlaneseq
          %v879 = vshrl.u32 %v878, 7
          %v880 = vsub.s32 0, %v879
          %v881 = vrot.slane %v871, %v880
          %v882 = vmul.f32 %v861, %v877
          %v883 = vmul.f32 %v862, %v881
          %v884 = vlaneseq
          %v885 = vshrl.u32 %v884, 7
          %v886 = vsub.s32 1, %v885
          %v887 = vrot.slane %v856, %v886
          %v888 = vlaneseq
          %v889 = vshrl.u32 %v888, 7
          %v890 = vsub.s32 3, %v889
          %v891 = vrot.slane %v856, %v890
          %v894 = vlaneseq
          %v895 = vshrl.u32 %v894, 7
          %v896 = vsub.s32 1, %v895
          %v897 = vrot.slane %v887, %v896
          %v898 = vlaneseq
          %v899 = vshrl.u32 %v898, 7
          %v900 = vsub.s32 1, %v899
          %v901 = vrot.slane %v891, %v900
          %v902 = vadd.f32 %v882, %v897
          %v903 = vadd.f32 %v883, %v901
          %v904 = vmax.f32 %v902, 0.0
          %v905 = vmax.f32 %v903, 0.0
          %v906 = vpack.c.bf16 %v904, %v904
          %v907 = vpack.c.bf16 %v905, %v905
          %v910 = vunpack.c.l.b16 %v906
          %v911 = vunpack.c.l.b16 %v907
          %v912 = vpack.c.b16 %v911, %v910
          %914 = vst [vmem:[#allocation2] sm:$0xff] %v912
        $region68: #{tpu_custom_call.1} parent=47 // pred_fallthru
          _
        %v915 = vld [vmem:[#allocation2] sm:$0xff]
        %v916 = vld [vmem:[%s319] sm:$0xff]
        %v917 = vld [vmem:[%s319 + $0x8] sm:$0xff]
        %v918 = vld [vmem:[%s319 + $0x10] sm:$0xff]
        %v919 = vld [vmem:[%s319 + $0x18] sm:$0xff]
        %v920 = vld [vmem:[%s319 + $0x20] sm:$0xff]
        %v921 = vld [vmem:[%s319 + $0x28] sm:$0xff]
        %v922 = vld [vmem:[%s319 + $0x30] sm:$0xff]
        %v923 = vld [vmem:[%s319 + $0x38] sm:$0xff]
        %v924 = vld [vmem:[%s319 + $0x40] sm:$0xff]
        %v925 = vld [vmem:[%s319 + $0x48] sm:$0xff]
        %v926 = vld [vmem:[%s319 + $0x50] sm:$0xff]
        %v927 = vld [vmem:[%s319 + $0x58] sm:$0xff]
        %v928 = vld [vmem:[%s319 + $0x60] sm:$0xff]
        %v929 = vld [vmem:[%s319 + $0x68] sm:$0xff]
        %v930 = vld [vmem:[%s319 + $0x70] sm:$0xff]
        %v931 = vld [vmem:[%s319 + $0x78] sm:$0xff]
        %v932 = vld [vmem:[%s319 + $0x80] sm:$0xff]
        %v933 = vld [vmem:[%s319 + $0x88] sm:$0xff]
        %v934 = vld [vmem:[%s319 + $0x90] sm:$0xff]
        %v935 = vld [vmem:[%s319 + $0x98] sm:$0xff]
        %v936 = vld [vmem:[%s319 + $0xa0] sm:$0xff]
        %v937 = vld [vmem:[%s319 + $0xa8] sm:$0xff]
        %v938 = vld [vmem:[%s319 + $0xb0] sm:$0xff]
        %v939 = vld [vmem:[%s319 + $0xb8] sm:$0xff]
        %v940 = vld [vmem:[%s319 + $0xc0] sm:$0xff]
        %v941 = vld [vmem:[%s319 + $0xc8] sm:$0xff]
        %v942 = vld [vmem:[%s319 + $0xd0] sm:$0xff]
        %v943 = vld [vmem:[%s319 + $0xd8] sm:$0xff]
        %v944 = vld [vmem:[%s319 + $0xe0] sm:$0xff]
        %v945 = vld [vmem:[%s319 + $0xe8] sm:$0xff]
        %v946 = vld [vmem:[%s319 + $0xf0] sm:$0xff]
        %v947 = vld [vmem:[%s319 + $0xf8] sm:$0xff]
        %v949 = vunpack.c.l.b16 %v915
        %v950 = vunpack.c.h.b16 %v915
        %v951 = vpack.c.b16 %v949, %v949
        %v952 = vpack.c.b16 %v950, %v950
        %v987 = vunpack.c.l.b16 %v916
        %v988 = vunpack.c.h.b16 %v916
        %v989 = vunpack.c.l.b16 %v917
        %v990 = vunpack.c.h.b16 %v917
        %v991 = vunpack.c.l.b16 %v918
        %v992 = vunpack.c.h.b16 %v918
        %v993 = vunpack.c.l.b16 %v919
        %v994 = vunpack.c.h.b16 %v919
        %v995 = vunpack.c.l.b16 %v920
        %v996 = vunpack.c.h.b16 %v920
        %v997 = vunpack.c.l.b16 %v921
        %v998 = vunpack.c.h.b16 %v921
        %v999 = vunpack.c.l.b16 %v922
        %v1000 = vunpack.c.h.b16 %v922
        %v1001 = vunpack.c.l.b16 %v923
        %v1002 = vunpack.c.h.b16 %v923
        %v1003 = vunpack.c.l.b16 %v924
        %v1004 = vunpack.c.h.b16 %v924
        %v1005 = vunpack.c.l.b16 %v925
        %v1006 = vunpack.c.h.b16 %v925
        %v1007 = vunpack.c.l.b16 %v926
        %v1008 = vunpack.c.h.b16 %v926
        %v1009 = vunpack.c.l.b16 %v927
        %v1010 = vunpack.c.h.b16 %v927
        %v1011 = vunpack.c.l.b16 %v928
        %v1012 = vunpack.c.h.b16 %v928
        %v1013 = vunpack.c.l.b16 %v929
        %v1014 = vunpack.c.h.b16 %v929
        %v1015 = vunpack.c.l.b16 %v930
        %v1016 = vunpack.c.h.b16 %v930
        %v1017 = vunpack.c.l.b16 %v931
        %v1018 = vunpack.c.h.b16 %v931
        %v1019 = vunpack.c.l.b16 %v932
        %v1020 = vunpack.c.h.b16 %v932
        %v1021 = vunpack.c.l.b16 %v933
        %v1022 = vunpack.c.h.b16 %v933
        %v1023 = vunpack.c.l.b16 %v934
        %v1024 = vunpack.c.h.b16 %v934
        %v1025 = vunpack.c.l.b16 %v935
        %v1026 = vunpack.c.h.b16 %v935
        %v1027 = vunpack.c.l.b16 %v936
        %v1028 = vunpack.c.h.b16 %v936
        %v1029 = vunpack.c.l.b16 %v937
        %v1030 = vunpack.c.h.b16 %v937
        %v1031 = vunpack.c.l.b16 %v938
        %v1032 = vunpack.c.h.b16 %v938
        %v1033 = vunpack.c.l.b16 %v939
        %v1034 = vunpack.c.h.b16 %v939
        %v1035 = vunpack.c.l.b16 %v940
        %v1036 = vunpack.c.h.b16 %v940
        %v1037 = vunpack.c.l.b16 %v941
        %v1038 = vunpack.c.h.b16 %v941
        %v1039 = vunpack.c.l.b16 %v942
        %v1040 = vunpack.c.h.b16 %v942
        %v1041 = vunpack.c.l.b16 %v943
        %v1042 = vunpack.c.h.b16 %v943
        %v1043 = vunpack.c.l.b16 %v944
        %v1044 = vunpack.c.h.b16 %v944
        %v1045 = vunpack.c.l.b16 %v945
        %v1046 = vunpack.c.h.b16 %v945
        %v1047 = vunpack.c.l.b16 %v946
        %v1048 = vunpack.c.h.b16 %v946
        %v1049 = vunpack.c.l.b16 %v947
        %v1050 = vunpack.c.h.b16 %v947
        %v1051 = vpack.c.b16 %v989, %v987
        %v1052 = vpack.c.b16 %v990, %v988
        %v1053 = vpack.c.b16 %v993, %v991
        %v1054 = vpack.c.b16 %v994, %v992
        %v1055 = vpack.c.b16 %v997, %v995
        %v1056 = vpack.c.b16 %v998, %v996
        %v1057 = vpack.c.b16 %v1001, %v999
        %v1058 = vpack.c.b16 %v1002, %v1000
        %v1059 = vpack.c.b16 %v1005, %v1003
        %v1060 = vpack.c.b16 %v1006, %v1004
        %v1061 = vpack.c.b16 %v1009, %v1007
        %v1062 = vpack.c.b16 %v1010, %v1008
        %v1063 = vpack.c.b16 %v1013, %v1011
        %v1064 = vpack.c.b16 %v1014, %v1012
        %v1065 = vpack.c.b16 %v1017, %v1015
        %v1066 = vpack.c.b16 %v1018, %v1016
        %v1067 = vpack.c.b16 %v1021, %v1019
        %v1068 = vpack.c.b16 %v1022, %v1020
        %v1069 = vpack.c.b16 %v1025, %v1023
        %v1070 = vpack.c.b16 %v1026, %v1024
        %v1071 = vpack.c.b16 %v1029, %v1027
        %v1072 = vpack.c.b16 %v1030, %v1028
        %v1073 = vpack.c.b16 %v1033, %v1031
        %v1074 = vpack.c.b16 %v1034, %v1032
        %v1075 = vpack.c.b16 %v1037, %v1035
        %v1076 = vpack.c.b16 %v1038, %v1036
        %v1077 = vpack.c.b16 %v1041, %v1039
        %v1078 = vpack.c.b16 %v1042, %v1040
        %v1079 = vpack.c.b16 %v1045, %v1043
        %v1080 = vpack.c.b16 %v1046, %v1044
        %v1081 = vpack.c.b16 %v1049, %v1047
        %v1082 = vpack.c.b16 %v1050, %v1048
        %1115 = vmatprep.subr.bf16.mxu0 %v1052
        %1116 = vmatpush1.bf16.msra.mxu0 %v1051
        %1117 = vmatprep.subr.bf16.mxu0 %v1054
        %1118 = vmatpush1.bf16.msra.mxu0 %v1053
        %1119 = vmatprep.subr.bf16.mxu0 %v1056
        %1120 = vmatpush1.bf16.msra.mxu0 %v1055
        %1121 = vmatprep.subr.bf16.mxu0 %v1058
        %1122 = vmatpush1.bf16.msra.mxu0 %v1057
        %1123 = vmatprep.subr.bf16.mxu0 %v1060
        %1124 = vmatpush1.bf16.msra.mxu0 %v1059
        %1125 = vmatprep.subr.bf16.mxu0 %v1062
        %1126 = vmatpush1.bf16.msra.mxu0 %v1061
        %1127 = vmatprep.subr.bf16.mxu0 %v1064
        %1128 = vmatpush1.bf16.msra.mxu0 %v1063
        %1129 = vmatprep.subr.bf16.mxu0 %v1066
        %1130 = vmatpush1.bf16.msra.mxu0 %v1065
        %1131 = vmatprep.subr.bf16.mxu0 %v1068
        %1132 = vmatpush1.bf16.msra.mxu0 %v1067
        %1133 = vmatprep.subr.bf16.mxu0 %v1070
        %1134 = vmatpush1.bf16.msra.mxu0 %v1069
        %1135 = vmatprep.subr.bf16.mxu0 %v1072
        %1136 = vmatpush1.bf16.msra.mxu0 %v1071
        %1137 = vmatprep.subr.bf16.mxu0 %v1074
        %1138 = vmatpush1.bf16.msra.mxu0 %v1073
        %1139 = vmatprep.subr.bf16.mxu0 %v1076
        %1140 = vmatpush1.bf16.msra.mxu0 %v1075
        %1141 = vmatprep.subr.bf16.mxu0 %v1078
        %1142 = vmatpush1.bf16.msra.mxu0 %v1077
        %1143 = vmatprep.subr.bf16.mxu0 %v1080
        %1144 = vmatpush1.bf16.msra.mxu0 %v1079
        %1145 = vmatprep.subr.bf16.mxu0 %v1082
        %1146 = vmatpush1.bf16.msra.mxu0 %v1081
        %1147 = vmatprep.mubr.bf16.mxu0 %v952
        %1148 = vmatmul.mubr.bf16.gmra.mrb[0].mxu0 %v951
        %v1149 = vpop.f32.mrb[0].mxu0
        %v1150 = vadd.f32 0.0, %v1149
        %v1151 = vpop.f32.mrb[0].mxu0
        %v1152 = vadd.f32 0.0, %v1151
        %v1153 = vpop.f32.mrb[0].mxu0
        %v1154 = vpop.f32.mrb[0].mxu0
        %1155 = vdwg.mxu0
        %v1156 = vrot.slane %v1150, 4
        %v1157 = vadd.f32 %v1150, %v1156
        %v1158 = vrot.slane %v1157, 2
        %v1159 = vadd.f32 %v1157, %v1158
        %v1160 = vrot.slane %v1159, 1
        %v1161 = vadd.f32 %v1159, %v1160
        %v1162 = vrot.slane %v1152, 4
        %v1163 = vadd.f32 %v1152, %v1162
        %v1164 = vrot.slane %v1163, 2
        %v1165 = vadd.f32 %v1163, %v1164
        %v1166 = vrot.slane %v1165, 1
        %v1167 = vadd.f32 %v1165, %v1166
        %v1168 = vrcp.pop 8.0
        %v1169 = vmul.f32 %v1161, %v1168
        %v1170 = vmul.f32 %v1167, %v1168
        %v1171 = vsub.f32 %v1150, %v1169
        %v1172 = vsub.f32 %v1152, %v1170
        %v1173 = vmul.f32 %v1171, %v1171
        %v1174 = vmul.f32 %v1172, %v1172
        %v1175 = vrot.slane %v1173, 4
        %v1176 = vadd.f32 %v1173, %v1175
        %v1177 = vrot.slane %v1176, 2
        %v1178 = vadd.f32 %v1176, %v1177
        %v1179 = vrot.slane %v1178, 1
        %v1180 = vadd.f32 %v1178, %v1179
        %v1181 = vrot.slane %v1174, 4
        %v1182 = vadd.f32 %v1174, %v1181
        %v1183 = vrot.slane %v1182, 2
        %v1184 = vadd.f32 %v1182, %v1183
        %v1185 = vrot.slane %v1184, 1
        %v1186 = vadd.f32 %v1184, %v1185
        %v1187 = vmul.f32 %v1180, %v1168
        %v1188 = vmul.f32 %v1186, %v1168
        %v1189 = vld [vmem:[%s360] sm:$0xf]
        %v1190 = vadd.f32 %v1187, 1e-05
        %v1191 = vadd.f32 %v1188, 1e-05
        %v1192 = vrsqrt.pop %v1190
        %v1193 = vrsqrt.pop %v1191
        %v1194 = vmul.f32 %v1171, %v1192
        %v1195 = vmul.f32 %v1172, %v1193
        %v1197 = vlaneseq
        %v1198 = vshrl.u32 %v1197, 7
        %v1199 = vsub.s32 0, %v1198
        %v1200 = vrot.slane %v1189, %v1199
        %v1201 = vlaneseq
        %v1202 = vshrl.u32 %v1201, 7
        %v1203 = vsub.s32 2, %v1202
        %v1204 = vrot.slane %v1189, %v1203
        %v1207 = vlaneseq
        %v1208 = vshrl.u32 %v1207, 7
        %v1209 = vsub.s32 0, %v1208
        %v1210 = vrot.slane %v1200, %v1209
        %v1211 = vlaneseq
        %v1212 = vshrl.u32 %v1211, 7
        %v1213 = vsub.s32 0, %v1212
        %v1214 = vrot.slane %v1204, %v1213
        %v1215 = vmul.f32 %v1194, %v1210
        %v1216 = vmul.f32 %v1195, %v1214
        %v1217 = vlaneseq
        %v1218 = vshrl.u32 %v1217, 7
        %v1219 = vsub.s32 1, %v1218
        %v1220 = vrot.slane %v1189, %v1219
        %v1221 = vlaneseq
        %v1222 = vshrl.u32 %v1221, 7
        %v1223 = vsub.s32 3, %v1222
        %v1224 = vrot.slane %v1189, %v1223
        %v1227 = vlaneseq
        %v1228 = vshrl.u32 %v1227, 7
        %v1229 = vsub.s32 1, %v1228
        %v1230 = vrot.slane %v1220, %v1229
        %v1231 = vlaneseq
        %v1232 = vshrl.u32 %v1231, 7
        %v1233 = vsub.s32 1, %v1232
        %v1234 = vrot.slane %v1224, %v1233
        %v1235 = vadd.f32 %v1215, %v1230
        %v1236 = vadd.f32 %v1216, %v1234
        %1237 = vst [vmem:[%s354] sm:$0xff] %v1235
        %1238 = vst [vmem:[%s354 + $0x8] sm:$0xff] %v1236
        %s1239 = sand.u32 %s191, 1
        %s1240 = scalar_lea.sflag [#allocation5], %s1239
        %s1241 = sand.u32 %s191, 1
        %s1242 = smul.addr %s1241, 16
        %s1243 = scalar_lea.vmem [#allocation11], %s1242
        // Predicated region
        $region69: #{tpu_custom_call.1} parent=47 // pred_check
          %p1244 = pneg %p201
        $region70: #{tpu_custom_call.1} parent=47 // pred_check_branch
          %1246 = sbr.rel (%p1244) target = $region72
        $region71: #{tpu_custom_call.1} parent=47 // pred_region
          %s1247 = smul.u32 2, %s26
          %s1249 = ssub.s32 256, 256
          %1250 = vsyncadd %s1240, %s1249
          %s1251 = smul.addr %s1247, 128
          %s1252 = scalar_lea.hbm %s7, %s1251
          %s1254 = sshll.u32 %s1243, 4
          %s1255 = int_to_ptr.vmem [resolvable:$true] %s1254
          %1257 = dma.vmem_to_hbm [thread:$0]  %s1255, 256, %s1252, %s1240
        $region72: #{tpu_custom_call.1} parent=47 // pred_fallthru
          _
      $region48: #{tpu_custom_call.1} parent=5 // pred_fallthru
        _
      %p1258 = scmp.le.s32.totalorder 2, %s21
      // Predicated region
      $region73: #{tpu_custom_call.1} parent=5 // pred_check
        %p1259 = pneg %p1258
      $region74: #{tpu_custom_call.1} parent=5 // pred_check_branch
        %1261 = sbr.rel (%p1259) target = $region76
      $region75: #{tpu_custom_call.1} parent=5 // pred_region
        %s1262 = ssub.s32 %s21, 2
        // Predicated region
        $region77: #{tpu_custom_call.1} parent=75 // pred_check
          %p1263 = pneg %p207
        $region78: #{tpu_custom_call.1} parent=75 // pred_check_branch
          %1265 = sbr.rel (%p1263) target = $region80
        $region79: #{tpu_custom_call.1} parent=75 // pred_region
          %s1266 = sand.u32 %s192, 1
          %s1267 = scalar_lea.sflag [#allocation5], %s1266
          %s1268 = sand.u32 %s192, 1
          %s1269 = smul.addr %s1268, 16
          %s1270 = scalar_lea.vmem [#allocation11], %s1269
          %1271 = dma.done %s1267, 256
        $region80: #{tpu_custom_call.1} parent=75 // pred_fallthru
          _
      $region76: #{tpu_custom_call.1} parent=5 // pred_fallthru
        _
    $region6: #{tpu_custom_call.1} parent=1 // loop_footer
      %s25 = sadd.s32 1, %s21
    $region7: #{tpu_custom_call.1} parent=1 // loop_footer_branch
      %20 = sbr.rel target = $region3
    $region8: #{tpu_custom_call.1} parent=1 // loop_exit
      _
    %1272 = vsyncpa [#allocation4], 1
    %s1273 = scalar_lea.sflag [#allocation4], 1
    %1274 = vsyncpa %s1273, 1
    %1275 = vsyncpa [#allocation7], 1
    %1276 = vsyncpa [#allocation10], 1
    %s1277 = scalar_lea.sflag [#allocation10], 1
    %1278 = vsyncpa %s1277, 1
    %1279 = vsyncpa [#allocation5], 1
    %s1280 = scalar_lea.sflag [#allocation5], 1
    %1281 = vsyncpa %s1280, 1

</llo_original>
